<compile_context>
chip_gen: v7x
topology: tpu7x:2x2x1
jax: 0.10.0
libtpu: 0.0.40
codegen_flags: <defaults>
</compile_context>

<pallas_src>
import jax
import jax.numpy as jnp
from jax.experimental import pallas as pl
from jax.experimental.pallas import tpu as pltpu


def _stats_pool_kernel(T):
    T_f = float(T)
    denom = float(max(T - 1, 1))  # torch.std default is the unbiased estimator (N-1)

    def kernel(x_ref, out_ref, sum_ref, sumsq_ref):
        t_idx = pl.program_id(1)

        @pl.when(t_idx == 0)
        def _init():
            sum_ref[...] = jnp.zeros_like(sum_ref)
            sumsq_ref[...] = jnp.zeros_like(sumsq_ref)

        # One (TILE_B, C, TILE_T) slab of the input; accumulate in f32 regardless
        # of the streaming dtype.
        xv = x_ref[...].astype(jnp.float32)
        sum_ref[...] += jnp.sum(xv, axis=-1)
        sumsq_ref[...] += jnp.sum(xv * xv, axis=-1)

        @pl.when(t_idx == pl.num_programs(1) - 1)
        def _finalize():
            mean = sum_ref[...] * (1.0 / T_f)                        # (TILE_B, C)
            var = (sumsq_ref[...] - T_f * mean * mean) / denom       # unbiased
            std = jnp.sqrt(jnp.maximum(var, 0.0))
            out_ref[...] = jnp.concatenate([mean, std], axis=-1).astype(out_ref.dtype)

    return kernel


def _pick_tile(n, candidates):
    for c in candidates:
        if c <= n and n % c == 0:
            return c
    return n  # fall back to the full dimension (always a legal block)


def stats_pool(x, *, tile_b=None, tile_t=None):
    """StatsPool forward: concat([x.mean(dim=2), x.std(dim=2)], dim=1).

    x: (B, C, T)  ->  (B, 2*C)
    """
    B, C, T = x.shape

    # Time tiles must be multiples of 128 lanes (or the whole axis); batch tiles
    # must be multiples of 8 sublanes for the output block (or the whole axis).
    if tile_t is None:
        tile_t = _pick_tile(T, (1024, 512, 256, 128))
    if tile_b is None:
        tile_b = _pick_tile(B, (128, 64, 32, 16, 8))

    grid = (B // tile_b, T // tile_t)
    kernel = _stats_pool_kernel(T)

    return pl.pallas_call(
        kernel,
        out_shape=jax.ShapeDtypeStruct((B, 2 * C), x.dtype),
        grid_spec=pltpu.PrefetchScalarGridSpec(
            num_scalar_prefetch=0,
            grid=grid,
            in_specs=[pl.BlockSpec((tile_b, C, tile_t), lambda i, j: (i, 0, j))],
            out_specs=pl.BlockSpec((tile_b, 2 * C), lambda i, j: (i, 0)),
            scratch_shapes=[
                pltpu.VMEM((tile_b, C), jnp.float32),   # running sum
                pltpu.VMEM((tile_b, C), jnp.float32),   # running sum of squares
            ],
        ),
        compiler_params=pltpu.CompilerParams(
            dimension_semantics=("parallel", "arbitrary"),
            vmem_limit_bytes=64 * 1024 * 1024,
        ),
    )(x)


if __name__ == "__main__":
    key = jax.random.PRNGKey(0)
    B, C, T = 2, 16, 256          # (batch, channels, time) — small but tile-exercising
    x = jax.random.normal(key, (B, C, T), dtype=jnp.float32)

    out = stats_pool(x)
    jax.block_until_ready(out)

    # Pure-JAX reference (torch.std default is unbiased -> ddof=1).
    ref = jnp.concatenate([jnp.mean(x, axis=2), jnp.std(x, axis=2, ddof=1)], axis=1)
    assert out.shape == (B, 2 * C)
    max_err = float(jnp.max(jnp.abs(out - ref)))
    assert max_err < 1e-3, f"mismatch vs reference: {max_err}"

    print("KERNEL_OK")
</pallas_src>

<mosaic_0001>
module attributes {stable_mosaic.version = 11 : i64} {
  func.func @kernel(%arg0: i32, %arg1: i32, %arg2: memref<2x16x256xf32, #tpu.memory_space<vmem>>, %arg3: memref<2x32xf32, #tpu.memory_space<vmem>>, %arg4: memref<2x16xf32, #tpu.memory_space<vmem>>, %arg5: memref<2x16xf32, #tpu.memory_space<vmem>>) attributes {dimension_semantics = [#tpu.dimension_semantics<parallel>, #tpu.dimension_semantics<arbitrary>], iteration_bounds = array<i64: 1, 1>, scalar_prefetch = 0 : i64, scratch_operands = 2 : i64, tpu.core_type = #tpu.core_type<tc>, window_params = [{transform_indices = @transform_0, window_bounds = array<i64: 2, 16, 256>}, {transform_indices = @transform_1, window_bounds = array<i64: 2, 32>}]} {
    %c0_i32 = arith.constant 0 : i32
    %0 = arith.cmpi eq, %arg1, %c0_i32 : i32
    %1 = arith.extui %0 : i1 to i32
    %c0_i32_0 = arith.constant 0 : i32
    %2 = arith.cmpi ne, %1, %c0_i32_0 : i32
    scf.if %2 {
      %cst_14 = arith.constant 0.000000e+00 : f32
      %16 = vector.broadcast %cst_14 : f32 to vector<2x16xf32>
      %c0_15 = arith.constant 0 : index
      %c0_16 = arith.constant 0 : index
      %17 = vector.load %arg4[%c0_15, %c0_16] : memref<2x16xf32, #tpu.memory_space<vmem>>, vector<2x16xf32>
      tpu.vector_store %arg4[%c0_15, %c0_16], %16 {strides = array<i32>} : memref<2x16xf32, #tpu.memory_space<vmem>>, vector<2x16xf32>,
      %cst_17 = arith.constant 0.000000e+00 : f32
      %18 = vector.broadcast %cst_17 : f32 to vector<2x16xf32>
      %c0_18 = arith.constant 0 : index
      %c0_19 = arith.constant 0 : index
      %19 = vector.load %arg5[%c0_18, %c0_19] : memref<2x16xf32, #tpu.memory_space<vmem>>, vector<2x16xf32>
      tpu.vector_store %arg5[%c0_18, %c0_19], %18 {strides = array<i32>} : memref<2x16xf32, #tpu.memory_space<vmem>>, vector<2x16xf32>,
    } else {
    }
    %c0 = arith.constant 0 : index
    %c0_1 = arith.constant 0 : index
    %c0_2 = arith.constant 0 : index
    %3 = vector.load %arg2[%c0, %c0_1, %c0_2] : memref<2x16x256xf32, #tpu.memory_space<vmem>>, vector<2x16x256xf32>
    %c0_3 = arith.constant 0 : index
    %c0_4 = arith.constant 0 : index
    %4 = vector.load %arg4[%c0_3, %c0_4] : memref<2x16xf32, #tpu.memory_space<vmem>>, vector<2x16xf32>
    %cst = arith.constant dense<0.000000e+00> : vector<2x16xf32>
    %5 = vector.multi_reduction <add>, %3, %cst [2] : vector<2x16x256xf32> to vector<2x16xf32>
    %6 = arith.addf %4, %5 : vector<2x16xf32>
    %c0_5 = arith.constant 0 : index
    %c0_6 = arith.constant 0 : index
    %7 = vector.load %arg4[%c0_5, %c0_6] : memref<2x16xf32, #tpu.memory_space<vmem>>, vector<2x16xf32>
    tpu.vector_store %arg4[%c0_5, %c0_6], %6 {strides = array<i32>} : memref<2x16xf32, #tpu.memory_space<vmem>>, vector<2x16xf32>,
    %c0_7 = arith.constant 0 : index
    %c0_8 = arith.constant 0 : index
    %8 = vector.load %arg5[%c0_7, %c0_8] : memref<2x16xf32, #tpu.memory_space<vmem>>, vector<2x16xf32>
    %9 = arith.mulf %3, %3 : vector<2x16x256xf32>
    %cst_9 = arith.constant dense<0.000000e+00> : vector<2x16xf32>
    %10 = vector.multi_reduction <add>, %9, %cst_9 [2] : vector<2x16x256xf32> to vector<2x16xf32>
    %11 = arith.addf %8, %10 : vector<2x16xf32>
    %c0_10 = arith.constant 0 : index
    %c0_11 = arith.constant 0 : index
    %12 = vector.load %arg5[%c0_10, %c0_11] : memref<2x16xf32, #tpu.memory_space<vmem>>, vector<2x16xf32>
    tpu.vector_store %arg5[%c0_10, %c0_11], %11 {strides = array<i32>} : memref<2x16xf32, #tpu.memory_space<vmem>>, vector<2x16xf32>,
    %c0_i32_12 = arith.constant 0 : i32
    %13 = arith.cmpi eq, %arg1, %c0_i32_12 : i32
    %14 = arith.extui %13 : i1 to i32
    %c0_i32_13 = arith.constant 0 : i32
    %15 = arith.cmpi ne, %14, %c0_i32_13 : i32
    scf.if %15 {
      %c0_14 = arith.constant 0 : index
      %c0_15 = arith.constant 0 : index
      %16 = vector.load %arg4[%c0_14, %c0_15] : memref<2x16xf32, #tpu.memory_space<vmem>>, vector<2x16xf32>
      %cst_16 = arith.constant 3.906250e-03 : f32
      %17 = vector.broadcast %cst_16 : f32 to vector<2x16xf32>
      %18 = arith.mulf %16, %17 : vector<2x16xf32>
      %c0_17 = arith.constant 0 : index
      %c0_18 = arith.constant 0 : index
      %19 = vector.load %arg5[%c0_17, %c0_18] : memref<2x16xf32, #tpu.memory_space<vmem>>, vector<2x16xf32>
      %cst_19 = arith.constant 2.560000e+02 : f32
      %20 = vector.broadcast %cst_19 : f32 to vector<2x16xf32>
      %21 = arith.mulf %20, %18 : vector<2x16xf32>
      %22 = arith.mulf %21, %18 : vector<2x16xf32>
      %23 = arith.subf %19, %22 : vector<2x16xf32>
      %cst_20 = arith.constant 2.550000e+02 : f32
      %24 = vector.broadcast %cst_20 : f32 to vector<2x16xf32>
      %25 = arith.divf %23, %24 : vector<2x16xf32>
      %cst_21 = arith.constant 0.000000e+00 : f32
      %26 = vector.broadcast %cst_21 : f32 to vector<2x16xf32>
      %27 = arith.maximumf %25, %26 : vector<2x16xf32>
      %28 = math.sqrt %27 : vector<2x16xf32>
      %29 = tpu.concatenate %18, %28 in 1 : vector<2x16xf32>, vector<2x16xf32> -> vector<2x32xf32>
      %c0_22 = arith.constant 0 : index
      %c0_23 = arith.constant 0 : index
      %30 = vector.load %arg3[%c0_22, %c0_23] : memref<2x32xf32, #tpu.memory_space<vmem>>, vector<2x32xf32>
      tpu.vector_store %arg3[%c0_22, %c0_23], %29 {strides = array<i32>} : memref<2x32xf32, #tpu.memory_space<vmem>>, vector<2x32xf32>,
    } else {
    }
    return
  }
  func.func @transform_0(%arg0: i32, %arg1: i32) -> (i32, i32, i32) {
    %c0_i32 = arith.constant 0 : i32
    %c0_i32_0 = arith.constant 0 : i32
    return %arg0, %c0_i32, %arg1 : i32, i32, i32
  }
  func.func @transform_1(%arg0: i32, %arg1: i32) -> (i32, i32) {
    %c0_i32 = arith.constant 0 : i32
    %c0_i32_0 = arith.constant 0 : i32
    return %arg0, %c0_i32 : i32, i32
  }
}

</mosaic_0001>

<llo_original>
// kernel: tpu_custom_call.1
$region0: #{tpu_custom_call.1}
  #allocation0 [shape = 'u32[]', space=smem, size = 0x4, offset = 0x4, fixed_abs, tag = 'smem constant byte address 0x4 - core index']
  #allocation1 [shape = 'u32[144,128]{1,0:T(1,128)}', space=vmem, size = 0x12000, scoped, tag = 'internal scratch']
  #allocation2 [shape = 'f32[2,16]{1,0:T(2,128)}', space=vmem, size = 0x400, scoped, tag = 'scratch operand']
  #allocation3 [shape = 'f32[2,16]{1,0:T(2,128)}', space=vmem, size = 0x400, scoped, tag = 'scratch operand']
  %s0 = inlined_call_operand.hbm [shape: f32[2,16,256], index: 0, kind: input, shape index: {}]
  %s1 = inlined_call_operand.hbm [shape: f32[2,32], index: 1, kind: output, shape index: {}]
  %s2 = sld [smem:[#allocation0]]
  $region26: #{tpu_custom_call.1} parent=0
    _
  %s4 = ssub.s32 1, %s2
  %s5 = scalar_select 0, %s4, %s2
  $region1: #{tpu_custom_call.1} parent=0
    #allocation4 [shape = 'u8[32768]{0}', space=vmem, size = 0x8000, scoped, tag = 'input window, operand 0, single buffered']
    #allocation5 [shape = 's32[1]{0}', space=sflag, size = 0x4, scoped, tag = 'scoped memory for tpu_custom_call.1']
    #allocation6 [shape = 's32[1]{0}', space=sflag, size = 0x4, scoped, tag = 'scoped memory for tpu_custom_call.1']
    #allocation7 [shape = 'u8[1024]{0}', space=vmem, size = 0x400, scoped, tag = 'output window, operand 0, single buffered']
    %6 = vsyncpa [#allocation5], 0
    %7 = vsyncpa [#allocation6], 0
    // Predicated region
    $region2: #{tpu_custom_call.1} parent=1 // pred_check
      _
    $region3: #{tpu_custom_call.1} parent=1 // pred_check_branch
      %9 = sbr.rel (0) target = $region5
    $region4: #{tpu_custom_call.1} parent=1 // pred_region
      %s11 = ssub.s32 1024, 1024
      %12 = vsyncadd [#allocation5], %s11
      %s13 = sshll.u32 [#allocation4], 4
      %s14 = int_to_ptr.vmem [resolvable:$true] %s13
      %19 = dma.hbm_to_vmem [thread:$0]  %s0, 1024, %s14, [#allocation5], 256, 256, 16
    $region5: #{tpu_custom_call.1} parent=1 // pred_fallthru
      _
    // Predicated region
    $region6: #{tpu_custom_call.1} parent=1 // pred_check
      _
    $region7: #{tpu_custom_call.1} parent=1 // pred_check_branch
      %21 = sbr.rel (0) target = $region9
    $region8: #{tpu_custom_call.1} parent=1 // pred_region
      %22 = dma.done [#allocation5], 1024
    $region9: #{tpu_custom_call.1} parent=1 // pred_fallthru
      _
    %p23 = scmp.eq.s32.totalorder 0, 0
    // Predicated region
    $region10: #{tpu_custom_call.1} parent=1 // pred_check
      %p24 = pneg %p23
    $region11: #{tpu_custom_call.1} parent=1 // pred_check_branch
      %26 = sbr.rel (%p24) target = $region13
    $region12: #{tpu_custom_call.1} parent=1 // pred_region
      %vm27 = vcmask 123904
      %28 = vst.msk [vmem:[#allocation2] sm:$0x3] %vm27, 0.0
      %29 = vst.msk [vmem:[#allocation3] sm:$0x3] %vm27, 0.0
    $region13: #{tpu_custom_call.1} parent=1 // pred_fallthru
      _
    %v30 = vld [vmem:[#allocation4] sm:$0xff]
    %v31 = vld [vmem:[#allocation4 + $0x8] sm:$0xff]
    %v32 = vld [vmem:[#allocation4 + $0x10] sm:$0xff]
    %v33 = vld [vmem:[#allocation4 + $0x18] sm:$0xff]
    %v34 = vld [vmem:[#allocation4 + $0x20] sm:$0xff]
    %v35 = vld [vmem:[#allocation4 + $0x28] sm:$0xff]
    %v36 = vld [vmem:[#allocation4 + $0x30] sm:$0xff]
    %v37 = vld [vmem:[#allocation4 + $0x38] sm:$0xff]
    %v38 = vld [vmem:[#allocation2] sm:$0x3]
    %v39 = vadd.f32 %v30, %v31
    %40 = vadd.xlane.f32.xlu0 %v39
    %v41 = vpop.xlane.xlu0 %40
    %v42 = vadd.f32 %v32, %v33
    %43 = vadd.xlane.f32.xlu0 %v42
    %v44 = vpop.xlane.xlu0 %43
    %v45 = vadd.f32 %v34, %v35
    %46 = vadd.xlane.f32.xlu0 %v45
    %v47 = vpop.xlane.xlu0 %46
    %v48 = vadd.f32 %v36, %v37
    %49 = vadd.xlane.f32.xlu0 %v48
    %v50 = vpop.xlane.xlu0 %49
    %v55 = vlaneseq
    %v56 = vand.u32 %v55, 127
    %v57 = vlaneseq
    %v58 = vshrl.u32 %v57, 7
    %v59 = vsub.s32 %v56, %v58
    %v60 = vrot.slane %v41, %v59
    %v61 = vadd.s32 %v56, 4294967288
    %v62 = vlaneseq
    %v63 = vshrl.u32 %v62, 7
    %v64 = vsub.s32 %v61, %v63
    %v65 = vrot.slane %v44, %v64
    %vm66 = vcmask 130112
    %v67 = vsel %vm66, %v65, %v60
    %v68 = vlaneseq
    %v69 = vshrl.u32 %v68, 7
    %v70 = vsub.s32 %v56, %v69
    %v71 = vrot.slane %v47, %v70
    %v72 = vlaneseq
    %v73 = vshrl.u32 %v72, 7
    %v74 = vsub.s32 %v61, %v73
    %v75 = vrot.slane %v50, %v74
    %v76 = vsel %vm66, %v75, %v71
    %vm77 = vcmask 1041409
    %v78 = vsel %vm77, %v76, %v67
    %v80 = vadd.f32 %v38, %v78
    %vm81 = vcmask 123904
    %82 = vst.msk [vmem:[#allocation2] sm:$0x3] %vm81, %v80
    %v83 = vld [vmem:[#allocation3] sm:$0x3]
    %v84 = vmul.f32 %v30, %v30
    %v85 = vmul.f32 %v31, %v31
    %v86 = vmul.f32 %v32, %v32
    %v87 = vmul.f32 %v33, %v33
    %v88 = vmul.f32 %v34, %v34
    %v89 = vmul.f32 %v35, %v35
    %v90 = vmul.f32 %v36, %v36
    %v91 = vmul.f32 %v37, %v37
    %v92 = vadd.f32 %v84, %v85
    %93 = vadd.xlane.f32.xlu0 %v92
    %v94 = vpop.xlane.xlu0 %93
    %v95 = vadd.f32 %v86, %v87
    %96 = vadd.xlane.f32.xlu0 %v95
    %v97 = vpop.xlane.xlu0 %96
    %v98 = vadd.f32 %v88, %v89
    %99 = vadd.xlane.f32.xlu0 %v98
    %v100 = vpop.xlane.xlu0 %99
    %v101 = vadd.f32 %v90, %v91
    %102 = vadd.xlane.f32.xlu0 %v101
    %v103 = vpop.xlane.xlu0 %102
    %v108 = vlaneseq
    %v109 = vshrl.u32 %v108, 7
    %v110 = vsub.s32 %v56, %v109
    %v111 = vrot.slane %v94, %v110
    %v112 = vlaneseq
    %v113 = vshrl.u32 %v112, 7
    %v114 = vsub.s32 %v61, %v113
    %v115 = vrot.slane %v97, %v114
    %v116 = vsel %vm66, %v115, %v111
    %v117 = vlaneseq
    %v118 = vshrl.u32 %v117, 7
    %v119 = vsub.s32 %v56, %v118
    %v120 = vrot.slane %v100, %v119
    %v121 = vlaneseq
    %v122 = vshrl.u32 %v121, 7
    %v123 = vsub.s32 %v61, %v122
    %v124 = vrot.slane %v103, %v123
    %v125 = vsel %vm66, %v124, %v120
    %v126 = vsel %vm77, %v125, %v116
    %v128 = vadd.f32 %v83, %v126
    %129 = vst.msk [vmem:[#allocation3] sm:$0x3] %vm81, %v128
    // Predicated region
    $region14: #{tpu_custom_call.1} parent=1 // pred_check
      %p130 = pneg %p23
    $region15: #{tpu_custom_call.1} parent=1 // pred_check_branch
      %132 = sbr.rel (%p130) target = $region17
    $region16: #{tpu_custom_call.1} parent=1 // pred_region
      %v133 = vld [vmem:[#allocation2] sm:$0x3]
      %v134 = vmul.f32 %v133, 0.00390625
      %v135 = vld [vmem:[#allocation3] sm:$0x3]
      %v136 = vmul.f32 %v134, 256.0
      %v137 = vmul.f32 %v136, %v134
      %v138 = vsub.f32 %v135, %v137
      %v139 = vrcp.pop 255.0
      %v140 = vmul.f32 %v138, %v139
      %v141 = vmax.f32 %v140, 0.0
      %v142 = vrsqrt.pop %v141
      %v143 = vmul.f32 %v141, %v142
      %vm144 = vcmp.eq.f32.partialorder %v141, inf
      %v145 = vsel %vm144, %v141, %v143
      %vm146 = vcmp.eq.f32.partialorder %v141, 0.0
      %v147 = vand.u32 %v141, 2147483648
      %v148 = vsel %vm146, %v147, %v145
      %150 = vrot.lane.b32.xlu0 %v148, 16
      %v151 = vpop.permute.xlu0 %150
      %vm153 = vcmask 130048
      %v154 = vsel %vm153, %v134, %v151
      %vm155 = vcmask 254976
      %156 = vst.msk [vmem:[#allocation7] sm:$0x3] %vm155, %v154
    $region17: #{tpu_custom_call.1} parent=1 // pred_fallthru
      _
    // Predicated region
    $region18: #{tpu_custom_call.1} parent=1 // pred_check
      _
    $region19: #{tpu_custom_call.1} parent=1 // pred_check_branch
      %158 = sbr.rel (0) target = $region21
    $region20: #{tpu_custom_call.1} parent=1 // pred_region
      %s160 = ssub.s32 32, 32
      %161 = vsyncadd [#allocation6], %s160
      %s163 = sshll.u32 [#allocation7], 4
      %s164 = int_to_ptr.vmem [resolvable:$true] %s163
      %166 = dma.vmem_to_hbm [thread:$0]  %s164, 32, %s1, [#allocation6]
    $region21: #{tpu_custom_call.1} parent=1 // pred_fallthru
      _
    // Predicated region
    $region22: #{tpu_custom_call.1} parent=1 // pred_check
      _
    $region23: #{tpu_custom_call.1} parent=1 // pred_check_branch
      %168 = sbr.rel (0) target = $region25
    $region24: #{tpu_custom_call.1} parent=1 // pred_region
      %169 = dma.done [#allocation6], 32
    $region25: #{tpu_custom_call.1} parent=1 // pred_fallthru
      _
    %170 = vsyncpa [#allocation5], 1
    %171 = vsyncpa [#allocation6], 1

</llo_original>
